<compile_context>
chip_gen: v6e
topology: v6e:2x2x1
jax: 0.10.0
libtpu: 0.0.40
codegen_flags: <defaults>
</compile_context>

<pallas_src>
import math

import jax
import jax.numpy as jnp
from jax.experimental import pallas as pl
from jax.experimental.pallas import tpu as pltpu


# --------------------------------------------------------------------------
# Kernel 1: fused fc_1 -> ReLU -> fc_2 (dblp branch).  x = relu(f @ W1^T) @ W2^T
# Weights stay resident in VMEM; no HBM round-trip of the intermediate x_out.
# --------------------------------------------------------------------------
def _fc_fused_kernel(feat_ref, w1t_ref, w2t_ref, x_ref):
    h = jnp.dot(feat_ref[...], w1t_ref[...], preferred_element_type=jnp.float32)
    h = jnp.maximum(h, 0.0)
    x_ref[...] = jnp.dot(h, w2t_ref[...], preferred_element_type=jnp.float32)


def fc_fused(feature, w1t, w2t):
    N, F = feature.shape
    F2, H2 = w1t.shape
    H2b, Hd = w2t.shape
    assert F == F2 and H2 == H2b
    return pl.pallas_call(
        _fc_fused_kernel,
        out_shape=jax.ShapeDtypeStruct((N, Hd), jnp.float32),
        grid=(1,),
        in_specs=(
            pl.BlockSpec((N, F), lambda i: (0, 0)),
            pl.BlockSpec((F, H2), lambda i: (0, 0)),
            pl.BlockSpec((H2, Hd), lambda i: (0, 0)),
        ),
        out_specs=pl.BlockSpec((N, Hd), lambda i: (0, 0)),
        compiler_params=pltpu.CompilerParams(
            dimension_semantics=("arbitrary",)),
    )(feature, w1t, w2t)


# --------------------------------------------------------------------------
# Kernel 1b: single linear layer (non-dblp branch).  grid=1, whole problem in VMEM.
# --------------------------------------------------------------------------
def _linear_kernel(x_ref, w_ref, o_ref):
    o_ref[...] = jnp.dot(x_ref[...], w_ref[...],
                         preferred_element_type=jnp.float32)


def pallas_linear(x, w):
    M, K = x.shape
    K2, Nc = w.shape
    assert K == K2
    return pl.pallas_call(
        _linear_kernel,
        out_shape=jax.ShapeDtypeStruct((M, Nc), jnp.float32),
        grid=(1,),
        in_specs=(
            pl.BlockSpec((M, K), lambda i: (0, 0)),
            pl.BlockSpec((K, Nc), lambda i: (0, 0)),
        ),
        out_specs=pl.BlockSpec((M, Nc), lambda i: (0, 0)),
        compiler_params=pltpu.CompilerParams(
            dimension_semantics=("arbitrary",)),
    )(x, w)


# --------------------------------------------------------------------------
# Kernel 2: fully fused per-graph pipeline.
#   For each graph g (grid axis, "parallel" -> v7x TC sharding):
#     h_1, z_neg  from  adj-propagation of [x | x_shuffled]   (one matmul pair)
#     z_pos       from  neighbor_adj-propagation of x
#     Bernstein(K=2) elementwise combine with theta[g]
#     loss[g] = triplet(h_1, z_pos, z_neg; alpha) + triplet(H, h_1, fake; beta)
#   Only h_1 (needed later) and the scalar loss[g] hit HBM.
# --------------------------------------------------------------------------
def _make_graph_kernel(alpha, beta, inv_n, hid):
    def kernel(theta_ref, adj_ref, nadj_ref, xc_ref, x_ref, hpar_ref, fake_ref,
               h1_ref, loss_ref):
        g = pl.program_id(0)
        t0 = theta_ref[g, 0]
        t1 = theta_ref[g, 1]
        t2 = theta_ref[g, 2]

        def combine(xin, px, ppx):
            # TODO(synk): Bernprop2 source not provided; BernNet-style order-2
            #             Bernstein filter assumed:
            #   B0 = 1/4 (x + 2Px + PPx), B1 = 1/2 (x - PPx), B2 = 1/4 (x - 2Px + PPx)
            return (t0 * 0.25 * (xin + 2.0 * px + ppx)
                    + t1 * 0.5 * (xin - ppx)
                    + t2 * 0.25 * (xin - 2.0 * px + ppx))

        adj = adj_ref[0]                       # (N, N)
        xc = xc_ref[...]                       # (N, 2*hid) = [x | x_shuffled]
        p_xc = jnp.dot(adj, xc, preferred_element_type=jnp.float32)
        pp_xc = jnp.dot(adj, p_xc, preferred_element_type=jnp.float32)
        hc = combine(xc, p_xc, pp_xc)          # (N, 2*hid) = [h_1 | z_neg]
        h_1 = hc[:, :hid]
        z_neg = hc[:, hid:]

        x = x_ref[...]                         # (N, hid)
        nadj = nadj_ref[0]
        px_p = jnp.dot(nadj, x, preferred_element_type=jnp.float32)
        ppx_p = jnp.dot(nadj, px_p, preferred_element_type=jnp.float32)
        z_pos = combine(x, px_p, ppx_p)

        def hinge_sum(a, p, n, margin):
            # TODO(synk): TripletContrast source not provided; squared-Euclidean
            #             margin triplet loss (mean over nodes) assumed.
            d_pos = jnp.sum((a - p) ** 2, axis=1)
            d_neg = jnp.sum((a - n) ** 2, axis=1)
            return jnp.sum(jnp.maximum(d_pos - d_neg + margin, 0.0))

        loss = (hinge_sum(h_1, z_pos, z_neg, alpha)
                + hinge_sum(hpar_ref[...], h_1, fake_ref[...], beta)) * inv_n

        h1_ref[...] = h_1[None]                       # (1, N, hid) block
        loss_ref[...] = jnp.reshape(loss, (1, 1, 1))  # one scalar per graph
    return kernel


def graph_pipeline(theta, adj_stack, nadj_stack, xc, x, h_param, fake,
                   *, alpha, beta):
    G, N, _ = adj_stack.shape
    Hd = x.shape[1]
    kernel = _make_graph_kernel(float(alpha), float(beta), 1.0 / float(N), Hd)
    h1, loss = pl.pallas_call(
        kernel,
        out_shape=(
            jax.ShapeDtypeStruct((G, N, Hd), jnp.float32),
            jax.ShapeDtypeStruct((G, 1, 1), jnp.float32),
        ),
        grid=(G,),
        in_specs=(
            pl.BlockSpec(memory_space=pltpu.MemorySpace.SMEM),   # theta (G, 3)
            pl.BlockSpec((1, N, N), lambda g: (g, 0, 0)),        # adj[g]
            pl.BlockSpec((1, N, N), lambda g: (g, 0, 0)),        # neighbor_adj[g]
            pl.BlockSpec((N, 2 * Hd), lambda g: (0, 0)),         # [x | x_shuffled]
            pl.BlockSpec((N, Hd), lambda g: (0, 0)),             # x
            pl.BlockSpec((N, Hd), lambda g: (0, 0)),             # H
            pl.BlockSpec((N, Hd), lambda g: (0, 0)),             # fake = H[idx]
        ),
        out_specs=(
            pl.BlockSpec((1, N, Hd), lambda g: (g, 0, 0)),
            pl.BlockSpec((1, 1, 1), lambda g: (g, 0, 0)),
        ),
        compiler_params=pltpu.CompilerParams(
            dimension_semantics=("parallel",)),   # graphs shard over v7x's 2 TCs
    )(theta, adj_stack, nadj_stack, xc, x, h_param, fake)
    return h1, loss


# --------------------------------------------------------------------------
# Kernel 3: pos_emb = mean_g h_1[g]  and  reg_loss = sum((H - pos_emb)^2),
# fused so h_stack is read once and pos_emb is not computed twice.
# --------------------------------------------------------------------------
def _posreg_kernel(hpar_ref, hstack_ref, pos_ref, reg_ref):
    pos = jnp.mean(hstack_ref[...], axis=0)          # (N, Hd)
    d = hpar_ref[...] - pos
    pos_ref[...] = pos
    reg_ref[...] = jnp.reshape(jnp.sum(d * d), (1, 1))


def posemb_reg(h_param, h_stack):
    G, N, Hd = h_stack.shape
    return pl.pallas_call(
        _posreg_kernel,
        out_shape=(
            jax.ShapeDtypeStruct((N, Hd), jnp.float32),
            jax.ShapeDtypeStruct((1, 1), jnp.float32),
        ),
        grid=(1,),
        in_specs=(
            pl.BlockSpec((N, Hd), lambda i: (0, 0)),
            pl.BlockSpec((G, N, Hd), lambda i: (0, 0, 0)),
        ),
        out_specs=(
            pl.BlockSpec((N, Hd), lambda i: (0, 0)),
            pl.BlockSpec((1, 1), lambda i: (0, 0)),
        ),
        compiler_params=pltpu.CompilerParams(
            dimension_semantics=("arbitrary",)),
    )(h_param, h_stack)


# --------------------------------------------------------------------------
# modeler.forward
# --------------------------------------------------------------------------
class Args:
    dataset = "dblp"          # exercises fc_1 -> relu -> fc_2 path
    ft_size = 32
    hid_units = 16
    nb_nodes = 16
    nb_graphs = 2
    isBias = False            # Linear layers created with bias=False
    isAttn = False            # TODO(synk): Attention module source not provided
    isSemi = False            # TODO(synk): LogReg module source not provided
    alpha = 0.5               # margin for cons
    beta = 0.4                # margin for cons1
    readout_func = None       # stored but unused in forward()


def modeler_forward(params, args, feature, adj, neighbor_adj, sparse,
                    msk, samp_bias1, samp_bias2, idx):
    # idx plays the role of np.random.permutation(nb_nodes) in the original.
    if args.dataset == "dblp":
        x = fc_fused(feature, params["W1"].T, params["W2"].T)
    else:
        x = pallas_linear(feature, params["W1"].T)

    fake = params["H"][idx]                       # glue: gather of shuffled H rows
    x_shuffled = x[idx]                           # glue: shuffled features (negatives)
    xc = jnp.concatenate([x, x_shuffled], axis=1)  # lane-packed [x | x_shuf]

    adj_stack = jnp.stack(adj)                    # (G, N, N)
    nadj_stack = jnp.stack(neighbor_adj)          # (G, N, N)

    h1_stack, per_graph_loss = graph_pipeline(
        params["theta"], adj_stack, nadj_stack, xc, x, params["H"], fake,
        alpha=args.alpha, beta=args.beta)
    loss = jnp.sum(per_graph_loss)                # 2-element sum; trivial in JAX

    pos_emb, reg = posemb_reg(params["H"], h1_stack)

    result = {"loss": loss,
              "pos_emb": pos_emb,                 # parity with self.pos_emb
              "reg_loss": reg[0, 0]}
    # TODO(synk): isAttn branch (Attention) and isSemi branch (LogReg) not
    #             provided -> disabled, as in the else-paths of the original.
    return result


# --------------------------------------------------------------------------
# main
# --------------------------------------------------------------------------
if __name__ == "__main__":
    args = Args()
    key = jax.random.PRNGKey(0)
    keys = jax.random.split(key, 10)

    N, F, Hd, G = args.nb_nodes, args.ft_size, args.hid_units, args.nb_graphs

    feature = jax.random.normal(keys[0], (N, F), jnp.float32)

    def make_adj(k):
        a = jax.random.uniform(k, (N, N), jnp.float32)
        a = (a + a.T) * 0.5
        a = (a > 0.6).astype(jnp.float32) + jnp.eye(N, dtype=jnp.float32)
        a = jnp.minimum(a, 1.0)
        return a / jnp.sum(a, axis=1, keepdims=True)   # row-normalized

    adj = [make_adj(keys[1]), make_adj(keys[2])]
    neighbor_adj = [make_adj(keys[3]), make_adj(keys[4])]

    # deterministic parameter init (shapes from modeler.__init__)
    w1_shape = (2 * Hd, F) if args.dataset == "dblp" else (Hd, F)
    params = {
        "W1": jax.random.normal(keys[5], w1_shape, jnp.float32)
              * (1.0 / math.sqrt(F)),
        "W2": jax.random.normal(keys[6], (Hd, 2 * Hd), jnp.float32)
              * (1.0 / math.sqrt(2 * Hd)),
        # xavier_normal_ for H: std = sqrt(2 / (fan_in + fan_out))
        "H": jax.random.normal(keys[7], (N, Hd), jnp.float32)
             * math.sqrt(2.0 / (N + Hd)),
        # Bernprop2(2): 3 Bernstein coefficients per graph, init to 1 (BernNet-style)
        "theta": jnp.ones((G, 3), jnp.float32),
    }

    # replaces np.random.permutation(nb_nodes) in forward, deterministically
    idx = jax.random.permutation(keys[8], N)

    result = modeler_forward(params, args, feature, adj, neighbor_adj,
                             sparse=False, msk=None,
                             samp_bias1=None, samp_bias2=None, idx=idx)
    jax.block_until_ready(result)
    print("KERNEL_OK")
</pallas_src>

<mosaic_0001>
module attributes {stable_mosaic.version = 11 : i64} {
  func.func @_fc_fused_kernel(%arg0: i32, %arg1: memref<16x32xf32, #tpu.memory_space<vmem>>, %arg2: memref<32x32xf32, #tpu.memory_space<vmem>>, %arg3: memref<32x16xf32, #tpu.memory_space<vmem>>, %arg4: memref<16x16xf32, #tpu.memory_space<vmem>>) attributes {dimension_semantics = [#tpu.dimension_semantics<arbitrary>], iteration_bounds = array<i64: 1>, scalar_prefetch = 0 : i64, scratch_operands = 0 : i64, tpu.core_type = #tpu.core_type<tc>, window_params = [{pipeline_mode = #tpu.pipeline_mode<synchronous>, transform_indices = @transform_0, window_bounds = array<i64: 16, 32>}, {pipeline_mode = #tpu.pipeline_mode<synchronous>, transform_indices = @transform_1, window_bounds = array<i64: 32, 32>}, {pipeline_mode = #tpu.pipeline_mode<synchronous>, transform_indices = @transform_2, window_bounds = array<i64: 32, 16>}, {pipeline_mode = #tpu.pipeline_mode<synchronous>, transform_indices = @transform_3, window_bounds = array<i64: 16, 16>}]} {
    %c0 = arith.constant 0 : index
    %c0_0 = arith.constant 0 : index
    %0 = vector.load %arg1[%c0, %c0_0] : memref<16x32xf32, #tpu.memory_space<vmem>>, vector<16x32xf32>
    %c0_1 = arith.constant 0 : index
    %c0_2 = arith.constant 0 : index
    %1 = vector.load %arg2[%c0_1, %c0_2] : memref<32x32xf32, #tpu.memory_space<vmem>>, vector<32x32xf32>
    %cst = arith.constant dense<0.000000e+00> : vector<16x32xf32>
    %2 = tpu.matmul %0, %1, %cst {dimension_numbers = #tpu.dot_dimension_numbers<[1], [0], [0], [1], [0, 0, 1, 1], [], []>} : vector<16x32xf32>, vector<32x32xf32>, vector<16x32xf32> -> vector<16x32xf32>
    %cst_3 = arith.constant 0.000000e+00 : f32
    %3 = vector.broadcast %cst_3 : f32 to vector<16x32xf32>
    %4 = arith.maximumf %2, %3 : vector<16x32xf32>
    %c0_4 = arith.constant 0 : index
    %c0_5 = arith.constant 0 : index
    %5 = vector.load %arg3[%c0_4, %c0_5] : memref<32x16xf32, #tpu.memory_space<vmem>>, vector<32x16xf32>
    %cst_6 = arith.constant dense<0.000000e+00> : vector<16x16xf32>
    %6 = tpu.matmul %4, %5, %cst_6 {dimension_numbers = #tpu.dot_dimension_numbers<[1], [0], [0], [1], [0, 0, 1, 1], [], []>} : vector<16x32xf32>, vector<32x16xf32>, vector<16x16xf32> -> vector<16x16xf32>
    %c0_7 = arith.constant 0 : index
    %c0_8 = arith.constant 0 : index
    %7 = vector.load %arg4[%c0_7, %c0_8] : memref<16x16xf32, #tpu.memory_space<vmem>>, vector<16x16xf32>
    tpu.vector_store %arg4[%c0_7, %c0_8], %6 {strides = array<i32>} : memref<16x16xf32, #tpu.memory_space<vmem>>, vector<16x16xf32>,
    return
  }
  func.func @transform_0(%arg0: i32) -> (i32, i32) {
    %c0_i32 = arith.constant 0 : i32
    %c0_i32_0 = arith.constant 0 : i32
    %c0_i32_1 = arith.constant 0 : i32
    return %c0_i32, %c0_i32_0 : i32, i32
  }
  func.func @transform_1(%arg0: i32) -> (i32, i32) {
    %c0_i32 = arith.constant 0 : i32
    %c0_i32_0 = arith.constant 0 : i32
    %c0_i32_1 = arith.constant 0 : i32
    return %c0_i32, %c0_i32_0 : i32, i32
  }
  func.func @transform_2(%arg0: i32) -> (i32, i32) {
    %c0_i32 = arith.constant 0 : i32
    %c0_i32_0 = arith.constant 0 : i32
    %c0_i32_1 = arith.constant 0 : i32
    return %c0_i32, %c0_i32_0 : i32, i32
  }
  func.func @transform_3(%arg0: i32) -> (i32, i32) {
    %c0_i32 = arith.constant 0 : i32
    %c0_i32_0 = arith.constant 0 : i32
    %c0_i32_1 = arith.constant 0 : i32
    return %c0_i32, %c0_i32_0 : i32, i32
  }
}

</mosaic_0001>

<llo_original>
// kernel: tpu_custom_call.1
$region0: #{tpu_custom_call.1}
  #allocation0 [shape = 'u32[]', space=smem, size = 0x4, offset = 0x4, fixed_abs, tag = 'smem constant byte address 0x4 - core index']
  #allocation1 [shape = 'u32[144,128]{1,0:T(1,128)}', space=vmem, size = 0x12000, scoped, tag = 'internal scratch']
  %s0 = inlined_call_operand.vmem [shape: f32[16,32], index: 0, kind: input, shape index: {}]
  %s1 = inlined_call_operand.vmem [shape: f32[32,32], index: 1, kind: input, shape index: {}]
  %s2 = inlined_call_operand.vmem [shape: f32[32,16], index: 2, kind: input, shape index: {}]
  %s3 = inlined_call_operand.hbm [shape: f32[16,16], index: 3, kind: output, shape index: {}]
  %s4 = sld [smem:[#allocation0]]
  $region22: #{tpu_custom_call.1} parent=0
    _
  %s6 = ssub.s32 1, %s4
  %s7 = scalar_select 0, %s6, %s4
  $region1: #{tpu_custom_call.1} parent=0
    #allocation2 [shape = 'u8[8192]{0}', space=vmem, size = 0x2000, scoped, tag = 'output window, operand 0, single buffered']
    #allocation3 [shape = 's32[1]{0}', space=sflag, size = 0x4, scoped, tag = 'scoped memory for tpu_custom_call.1']
    %8 = vsyncpa [#allocation3], 0
    // Predicated region
    $region2: #{tpu_custom_call.1} parent=1 // pred_check
      _
    $region3: #{tpu_custom_call.1} parent=1 // pred_check_branch
      %10 = sbr.rel (0) target = $region5
    $region4: #{tpu_custom_call.1} parent=1 // pred_region
      _
    $region5: #{tpu_custom_call.1} parent=1 // pred_fallthru
      _
    // Predicated region
    $region6: #{tpu_custom_call.1} parent=1 // pred_check
      _
    $region7: #{tpu_custom_call.1} parent=1 // pred_check_branch
      %12 = sbr.rel (0) target = $region9
    $region8: #{tpu_custom_call.1} parent=1 // pred_region
      _
    $region9: #{tpu_custom_call.1} parent=1 // pred_fallthru
      _
    // Predicated region
    $region10: #{tpu_custom_call.1} parent=1 // pred_check
      _
    $region11: #{tpu_custom_call.1} parent=1 // pred_check_branch
      %14 = sbr.rel (0) target = $region13
    $region12: #{tpu_custom_call.1} parent=1 // pred_region
      _
    $region13: #{tpu_custom_call.1} parent=1 // pred_fallthru
      _
    %v15 = vld [vmem:[%s0] sm:$0xff]
    %v16 = vld [vmem:[%s0 + $0x8] sm:$0xff]
    %v17 = vld [vmem:[%s1] sm:$0xff]
    %v18 = vld [vmem:[%s1 + $0x8] sm:$0xff]
    %v19 = vld [vmem:[%s1 + $0x10] sm:$0xff]
    %v20 = vld [vmem:[%s1 + $0x18] sm:$0xff]
    %vm21 = vcmask 261120
    %v23 = vsel %vm21, %v15, 0
    %v26 = vsel %vm21, %v16, 0
    %28 = vmatprep.subr.mxu0 0.0
    %29 = vmatpush1.msra.mxu0 0.0
    %30 = vmatprep.subr.mxu0 0.0
    %31 = vmatpush1.msra.mxu0 0.0
    %32 = vmatprep.subr.mxu0 0.0
    %33 = vmatpush1.msra.mxu0 0.0
    %34 = vmatprep.subr.mxu0 0.0
    %35 = vmatpush1.msra.mxu0 0.0
    %36 = vmatprep.subr.mxu0 0.0
    %37 = vmatpush1.msra.mxu0 0.0
    %38 = vmatprep.subr.mxu0 0.0
    %39 = vmatpush1.msra.mxu0 0.0
    %40 = vmatprep.subr.mxu0 0.0
    %41 = vmatpush1.msra.mxu0 0.0
    %42 = vmatprep.subr.mxu0 0.0
    %43 = vmatpush1.msra.mxu0 0.0
    %44 = vmatprep.subr.mxu0 0.0
    %45 = vmatpush1.msra.mxu0 0.0
    %46 = vmatprep.subr.mxu0 0.0
    %47 = vmatpush1.msra.mxu0 0.0
    %48 = vmatprep.subr.mxu0 0.0
    %49 = vmatpush1.msra.mxu0 0.0
    %50 = vmatprep.subr.mxu0 0.0
    %51 = vmatpush1.msra.mxu0 0.0
    %52 = vmatprep.subr.mxu0 0.0
    %53 = vmatpush1.msra.mxu0 %v20
    %54 = vmatprep.subr.mxu0 0.0
    %55 = vmatpush1.msra.mxu0 %v19
    %56 = vmatprep.subr.mxu0 0.0
    %57 = vmatpush1.msra.mxu0 %v18
    %58 = vmatprep.subr.mxu0 0.0
    %59 = vmatpush1.msra.mxu0 %v17
    %60 = vmatprep.subr.mxu0 0.0
    %61 = vmatpush2.msra.mxu0 0.0
    %62 = vmatprep.subr.mxu0 0.0
    %63 = vmatpush2.msra.mxu0 0.0
    %64 = vmatprep.subr.mxu0 0.0
    %65 = vmatpush2.msra.mxu0 0.0
    %66 = vmatprep.subr.mxu0 0.0
    %67 = vmatpush2.msra.mxu0 0.0
    %68 = vmatprep.subr.mxu0 0.0
    %69 = vmatpush2.msra.mxu0 0.0
    %70 = vmatprep.subr.mxu0 0.0
    %71 = vmatpush2.msra.mxu0 0.0
    %72 = vmatprep.subr.mxu0 0.0
    %73 = vmatpush2.msra.mxu0 0.0
    %74 = vmatprep.subr.mxu0 0.0
    %75 = vmatpush2.msra.mxu0 0.0
    %76 = vmatprep.subr.mxu0 0.0
    %77 = vmatpush2.msra.mxu0 0.0
    %78 = vmatprep.subr.mxu0 0.0
    %79 = vmatpush2.msra.mxu0 0.0
    %80 = vmatprep.subr.mxu0 0.0
    %81 = vmatpush2.msra.mxu0 0.0
    %82 = vmatprep.subr.mxu0 0.0
    %83 = vmatpush2.msra.mxu0 0.0
    %84 = vmatprep.subr.mxu0 0.0
    %85 = vmatpush2.msra.mxu0 0.0
    %86 = vmatprep.subr.mxu0 0.0
    %87 = vmatpush2.msra.mxu0 0.0
    %88 = vmatprep.subr.mxu0 0.0
    %89 = vmatpush2.msra.mxu0 0.0
    %90 = vmatprep.subr.mxu0 0.0
    %91 = vmatpush2.msra.mxu0 0.0
    %92 = vmatprep.mubr.f32.mxu0 0.0
    %93 = vmatmul.mubr.f32.gmra.mxu0 %v23
    %v94 = vpop.f32.mrf.mxu0
    %v95 = vadd.f32 0.0, %v94
    %v96 = vpop.f32.mrf.mxu0
    %97 = vmatprep.mubr.f32.mxu0 0.0
    %98 = vmatmul.mubr.f32.gmra.mxu0 %v26
    %v99 = vpop.f32.mrf.mxu0
    %v100 = vadd.f32 0.0, %v99
    %v101 = vpop.f32.mrf.mxu0
    %102 = vdwg.mxu0
    %v103 = vmax.f32 %v95, 0.0
    %v104 = vmax.f32 %v100, 0.0
    %v105 = vld [vmem:[%s2] sm:$0xff]
    %v106 = vld [vmem:[%s2 + $0x8] sm:$0xff]
    %v107 = vld [vmem:[%s2 + $0x10] sm:$0xff]
    %v108 = vld [vmem:[%s2 + $0x18] sm:$0xff]
    %v110 = vsel %vm21, %v103, 0
    %v113 = vsel %vm21, %v104, 0
    %115 = vmatprep.subr.mxu0 0.0
    %116 = vmatpush1.msra.mxu0 0.0
    %117 = vmatprep.subr.mxu0 0.0
    %118 = vmatpush1.msra.mxu0 0.0
    %119 = vmatprep.subr.mxu0 0.0
    %120 = vmatpush1.msra.mxu0 0.0
    %121 = vmatprep.subr.mxu0 0.0
    %122 = vmatpush1.msra.mxu0 0.0
    %123 = vmatprep.subr.mxu0 0.0
    %124 = vmatpush1.msra.mxu0 0.0
    %125 = vmatprep.subr.mxu0 0.0
    %126 = vmatpush1.msra.mxu0 0.0
    %127 = vmatprep.subr.mxu0 0.0
    %128 = vmatpush1.msra.mxu0 0.0
    %129 = vmatprep.subr.mxu0 0.0
    %130 = vmatpush1.msra.mxu0 0.0
    %131 = vmatprep.subr.mxu0 0.0
    %132 = vmatpush1.msra.mxu0 0.0
    %133 = vmatprep.subr.mxu0 0.0
    %134 = vmatpush1.msra.mxu0 0.0
    %135 = vmatprep.subr.mxu0 0.0
    %136 = vmatpush1.msra.mxu0 0.0
    %137 = vmatprep.subr.mxu0 0.0
    %138 = vmatpush1.msra.mxu0 0.0
    %139 = vmatprep.subr.mxu0 0.0
    %140 = vmatpush1.msra.mxu0 %v108
    %141 = vmatprep.subr.mxu0 0.0
    %142 = vmatpush1.msra.mxu0 %v107
    %143 = vmatprep.subr.mxu0 0.0
    %144 = vmatpush1.msra.mxu0 %v106
    %145 = vmatprep.subr.mxu0 0.0
    %146 = vmatpush1.msra.mxu0 %v105
    %147 = vmatprep.subr.mxu0 0.0
    %148 = vmatpush2.msra.mxu0 0.0
    %149 = vmatprep.subr.mxu0 0.0
    %150 = vmatpush2.msra.mxu0 0.0
    %151 = vmatprep.subr.mxu0 0.0
    %152 = vmatpush2.msra.mxu0 0.0
    %153 = vmatprep.subr.mxu0 0.0
    %154 = vmatpush2.msra.mxu0 0.0
    %155 = vmatprep.subr.mxu0 0.0
    %156 = vmatpush2.msra.mxu0 0.0
    %157 = vmatprep.subr.mxu0 0.0
    %158 = vmatpush2.msra.mxu0 0.0
    %159 = vmatprep.subr.mxu0 0.0
    %160 = vmatpush2.msra.mxu0 0.0
    %161 = vmatprep.subr.mxu0 0.0
    %162 = vmatpush2.msra.mxu0 0.0
    %163 = vmatprep.subr.mxu0 0.0
    %164 = vmatpush2.msra.mxu0 0.0
    %165 = vmatprep.subr.mxu0 0.0
    %166 = vmatpush2.msra.mxu0 0.0
    %167 = vmatprep.subr.mxu0 0.0
    %168 = vmatpush2.msra.mxu0 0.0
    %169 = vmatprep.subr.mxu0 0.0
    %170 = vmatpush2.msra.mxu0 0.0
    %171 = vmatprep.subr.mxu0 0.0
    %172 = vmatpush2.msra.mxu0 0.0
    %173 = vmatprep.subr.mxu0 0.0
    %174 = vmatpush2.msra.mxu0 0.0
    %175 = vmatprep.subr.mxu0 0.0
    %176 = vmatpush2.msra.mxu0 0.0
    %177 = vmatprep.subr.mxu0 0.0
    %178 = vmatpush2.msra.mxu0 0.0
    %179 = vmatprep.mubr.f32.mxu0 0.0
    %180 = vmatmul.mubr.f32.gmra.mxu0 %v110
    %v181 = vpop.f32.mrf.mxu0
    %v182 = vadd.f32 0.0, %v181
    %v183 = vpop.f32.mrf.mxu0
    %184 = vmatprep.mubr.f32.mxu0 0.0
    %185 = vmatmul.mubr.f32.gmra.mxu0 %v113
    %v186 = vpop.f32.mrf.mxu0
    %v187 = vadd.f32 0.0, %v186
    %v188 = vpop.f32.mrf.mxu0
    %189 = vdwg.mxu0
    %vm190 = vcmask 130048
    %191 = vst.msk [vmem:[#allocation2] sm:$0xff] %vm190, %v182
    %192 = vst.msk [vmem:[#allocation2 + $0x8] sm:$0xff] %vm190, %v187
    // Predicated region
    $region14: #{tpu_custom_call.1} parent=1 // pred_check
      _
    $region15: #{tpu_custom_call.1} parent=1 // pred_check_branch
      %194 = sbr.rel (0) target = $region17
    $region16: #{tpu_custom_call.1} parent=1 // pred_region
      %s196 = ssub.s32 256, 256
      %197 = vsyncadd [#allocation3], %s196
      %s198 = sshll.u32 [#allocation2], 4
      %s199 = int_to_ptr.vmem [resolvable:$true] %s198
      %204 = dma.vmem_to_hbm [thread:$0]  %s199, 256, %s3, [#allocation3], 128, 128, 8
    $region17: #{tpu_custom_call.1} parent=1 // pred_fallthru
      _
    // Predicated region
    $region18: #{tpu_custom_call.1} parent=1 // pred_check
      _
    $region19: #{tpu_custom_call.1} parent=1 // pred_check_branch
      %206 = sbr.rel (0) target = $region21
    $region20: #{tpu_custom_call.1} parent=1 // pred_region
      %207 = dma.done [#allocation3], 256
    $region21: #{tpu_custom_call.1} parent=1 // pred_fallthru
      _
    %208 = vsyncpa [#allocation3], 1

</llo_original>
